<compile_context>
chip_gen: v6e
topology: v6e:2x2x1
jax: 0.10.0
libtpu: 0.0.40
codegen_flags: <defaults>
</compile_context>

<pallas_src>
from functools import partial

import jax
import jax.numpy as jnp
from jax.experimental import pallas as pl
from jax.experimental.pallas import tpu as pltpu

LANE = 128
SUBLANE = 8


def _round_up(n, m):
    return ((n + m - 1) // m) * m


def actor_kernel(x_ref, w1_ref, b1_ref, w2_ref, b2_ref, wh_ref, bh_ref,
                 lo_ref, hi_ref, out_ref):
    # Shared MLP: Linear -> ReLU -> Linear -> ReLU (output activation is ReLU).
    # bf16 operands on the MXU, f32 accumulation, f32 bias/activation math.
    x = x_ref[...].astype(jnp.bfloat16)
    h = jnp.dot(x, w1_ref[...], preferred_element_type=jnp.float32)
    h = jnp.maximum(h + b1_ref[...], 0.0)
    h = jnp.dot(h.astype(jnp.bfloat16), w2_ref[...],
                preferred_element_type=jnp.float32)
    h = jnp.maximum(h + b2_ref[...], 0.0)

    # Fused heads: one MXU push yields [ mu | sigma | zero-pad ] lanes.
    o = jnp.dot(h.astype(jnp.bfloat16), wh_ref[...],
                preferred_element_type=jnp.float32) + bh_ref[...]

    # clamp(1e-6, 1) only on the sigma lanes, via precomputed per-lane bounds
    # (mu / pad lanes have -inf/+inf bounds -> passed through untouched).
    out_ref[...] = jnp.minimum(jnp.maximum(o, lo_ref[...]), hi_ref[...])


def prepare_params(params):
    """One-time packing: fuse the mu|sigma heads, pad lane dims to 128, cast
    matmul weights to bf16.  The returned tuple is reused by every
    actor_forward call, so per-call HBM traffic is just x + the output slab."""
    (w1, b1), (w2, b2), (wmu, bmu), (wsg, bsg) = params
    F, H1 = w1.shape
    H2 = w2.shape[1]
    A = wmu.shape[1]

    H1_pad = _round_up(H1, LANE)
    H2_pad = _round_up(H2, LANE)
    OUT_pad = _round_up(2 * A, LANE)

    def pad2(a, r, c):
        return jnp.pad(a, ((0, r - a.shape[0]), (0, c - a.shape[1])))

    # Only the lane (output) dims are padded; contraction dims keep their true
    # (or previously padded) extents so x never needs lane padding.
    w1p = pad2(w1, F, H1_pad).astype(jnp.bfloat16)
    b1p = pad2(b1, 1, H1_pad)
    w2p = pad2(w2, H1_pad, H2_pad).astype(jnp.bfloat16)
    b2p = pad2(b2, 1, H2_pad)
    whp = pad2(jnp.concatenate([wmu, wsg], axis=1), H2_pad, OUT_pad).astype(jnp.bfloat16)
    bhp = pad2(jnp.concatenate([bmu, bsg], axis=1), 1, OUT_pad)

    # Per-lane clamp bounds: identity for mu / pad lanes, [1e-6, 1] for sigma.
    lane = jnp.arange(OUT_pad)
    is_sigma = (lane >= A) & (lane < 2 * A)
    lo = jnp.where(is_sigma, 1e-6, -jnp.inf).astype(jnp.float32)[None, :]
    hi = jnp.where(is_sigma, 1.0, jnp.inf).astype(jnp.float32)[None, :]

    packed = (w1p, b1p, w2p, b2p, whp, bhp, lo, hi)
    return packed, A


def _choose_block_b(batch):
    b8 = _round_up(batch, SUBLANE)
    if b8 < 128:
        return b8                                    # one tile, one grid step
    # >=2 parallel grid steps once the batch is worth splitting (v7x megacore),
    # tiles capped at 2048 rows so v5e/v6e amortise the ~0.35us/step overhead
    # without bloating the batch pad.  VMEM stays far below every gen's limit.
    return min(2048, _round_up((b8 + 1) // 2, SUBLANE))


@partial(jax.jit, static_argnames=("action_dims",))
def actor_forward(x, packed, action_dims):
    """x: (B, in_features) f32.  Returns (means, stds), each (B, action_dims)."""
    w1p, b1p, w2p, b2p, whp, bhp, lo, hi = packed
    B, F = x.shape
    assert F == w1p.shape[0]
    H1_pad = w1p.shape[1]
    H2_pad = w2p.shape[1]
    OUT_pad = whp.shape[1]

    block_b = _choose_block_b(B)
    B_pad = _round_up(B, block_b)
    if B_pad != B:
        # Only the batch dim is ever padded (a few zero rows); the feature dim
        # keeps its true extent, so no 128-lane-inflated copy of x is written.
        x = jnp.pad(x, ((0, B_pad - B), (0, 0)))

    # Weights / biases / clamp bounds: full-array blocks, constant across the
    # batch grid axis (tiny: ~70 KiB bf16 weights + a few f32 rows).
    def full(shape):
        return pl.BlockSpec(shape, lambda i: (0,) * len(shape))

    out = pl.pallas_call(
        actor_kernel,
        out_shape=jax.ShapeDtypeStruct((B_pad, OUT_pad), jnp.float32),
        grid_spec=pltpu.PrefetchScalarGridSpec(
            num_scalar_prefetch=0,
            grid=(B_pad // block_b,),
            in_specs=[
                pl.BlockSpec((block_b, F), lambda i: (i, 0)),  # x batch tile
                full((F, H1_pad)), full((1, H1_pad)),
                full((H1_pad, H2_pad)), full((1, H2_pad)),
                full((H2_pad, OUT_pad)), full((1, OUT_pad)),
                full((1, OUT_pad)), full((1, OUT_pad)),        # clamp lo / hi
            ],
            out_specs=pl.BlockSpec((block_b, OUT_pad), lambda i: (i, 0)),
        ),
        compiler_params=pltpu.CompilerParams(
            dimension_semantics=("parallel",)),
    )(x, w1p, b1p, w2p, b2p, whp, bhp, lo, hi)

    means = out[:B, :action_dims]
    stds = out[:B, action_dims:2 * action_dims]
    return means, stds


def init_linear(key, fan_in, fan_out):
    """Deterministic PyTorch-style init: U(-1/sqrt(fan_in), 1/sqrt(fan_in)).
    Weight stored as (fan_in, fan_out) (i.e. transposed vs. nn.Linear)."""
    kw, kb = jax.random.split(key)
    bound = 1.0 / (fan_in ** 0.5)
    w = jax.random.uniform(kw, (fan_in, fan_out), jnp.float32, -bound, bound)
    b = jax.random.uniform(kb, (1, fan_out), jnp.float32, -bound, bound)
    return w, b


if __name__ == "__main__":
    # Small shapes consistent with the module:
    #   in_features=16, hidden_features=[32, 32], action_dims=4, batch=64
    in_features = 16
    hidden_features = [32, 32]
    action_dims = 4
    batch = 64

    key = jax.random.PRNGKey(0)
    k_x, k1, k2, k3, k4 = jax.random.split(key, 5)

    x = jax.random.normal(k_x, (batch, in_features), jnp.float32)

    params = (
        init_linear(k1, in_features, hidden_features[0]),         # shared layer 0
        init_linear(k2, hidden_features[0], hidden_features[1]),  # shared layer 1
        init_linear(k3, hidden_features[1], action_dims),         # mu head
        init_linear(k4, hidden_features[1], action_dims),         # sigma head
    )

    packed, A = prepare_params(params)   # one-time pad / head-fuse / bf16 cast

    means, stds = actor_forward(x, packed, action_dims=A)
    jax.block_until_ready((means, stds))

    # Reference check in plain JAX (f32 math).  bf16 MXU operands (with f32
    # accumulation) => loosened tolerance vs. the f32 PyTorch-style reference.
    (w1, b1), (w2, b2), (wmu, bmu), (wsg, bsg) = params
    h = jnp.maximum(x @ w1 + b1, 0.0)
    h = jnp.maximum(h @ w2 + b2, 0.0)
    ref_mu = h @ wmu + bmu
    ref_std = jnp.clip(h @ wsg + bsg, 1e-6, 1.0)
    assert means.shape == (batch, action_dims) and stds.shape == (batch, action_dims)
    assert jnp.allclose(means, ref_mu, atol=2e-2, rtol=2e-2), "means mismatch"
    assert jnp.allclose(stds, ref_std, atol=2e-2, rtol=2e-2), "stds mismatch"
    assert bool(jnp.all(stds >= 1e-6)) and bool(jnp.all(stds <= 1.0))

    # Also exercise the multi-step (megacore) path with batch-row padding.
    x_big = jax.random.normal(k_x, (300, in_features), jnp.float32)
    mu_b, std_b = actor_forward(x_big, packed, action_dims=A)
    jax.block_until_ready((mu_b, std_b))
    hb = jnp.maximum(x_big @ w1 + b1, 0.0)
    hb = jnp.maximum(hb @ w2 + b2, 0.0)
    assert jnp.allclose(mu_b, hb @ wmu + bmu, atol=2e-2, rtol=2e-2), "big-batch means mismatch"
    assert jnp.allclose(std_b, jnp.clip(hb @ wsg + bsg, 1e-6, 1.0),
                        atol=2e-2, rtol=2e-2), "big-batch stds mismatch"

    # TODO(synk): distributions.Normal.sample()/log_prob() are host-side
    # reparameterised ops over (means, stds) and the Adam optimizer is
    # training-side; both are outside the forward hot path, left to plain JAX.
    print("KERNEL_OK")
</pallas_src>

<mosaic_0001>
module attributes {stable_mosaic.version = 11 : i64} {
  func.func @actor_kernel(%arg0: i32, %arg1: memref<64x16xf32, #tpu.memory_space<vmem>>, %arg2: memref<16x128xbf16, #tpu.memory_space<vmem>>, %arg3: memref<1x128xf32, #tpu.memory_space<vmem>>, %arg4: memref<128x128xbf16, #tpu.memory_space<vmem>>, %arg5: memref<1x128xf32, #tpu.memory_space<vmem>>, %arg6: memref<128x128xbf16, #tpu.memory_space<vmem>>, %arg7: memref<1x128xf32, #tpu.memory_space<vmem>>, %arg8: memref<1x128xf32, #tpu.memory_space<vmem>>, %arg9: memref<1x128xf32, #tpu.memory_space<vmem>>, %arg10: memref<64x128xf32, #tpu.memory_space<vmem>>) attributes {dimension_semantics = [#tpu.dimension_semantics<parallel>], iteration_bounds = array<i64: 1>, scalar_prefetch = 0 : i64, scratch_operands = 0 : i64, tpu.core_type = #tpu.core_type<tc>, window_params = [{transform_indices = @transform_0, window_bounds = array<i64: 64, 16>}, {pipeline_mode = #tpu.pipeline_mode<synchronous>, transform_indices = @transform_1, window_bounds = array<i64: 16, 128>}, {pipeline_mode = #tpu.pipeline_mode<synchronous>, transform_indices = @transform_2, window_bounds = array<i64: 1, 128>}, {pipeline_mode = #tpu.pipeline_mode<synchronous>, transform_indices = @transform_3, window_bounds = array<i64: 128, 128>}, {pipeline_mode = #tpu.pipeline_mode<synchronous>, transform_indices = @transform_4, window_bounds = array<i64: 1, 128>}, {pipeline_mode = #tpu.pipeline_mode<synchronous>, transform_indices = @transform_5, window_bounds = array<i64: 128, 128>}, {pipeline_mode = #tpu.pipeline_mode<synchronous>, transform_indices = @transform_6, window_bounds = array<i64: 1, 128>}, {pipeline_mode = #tpu.pipeline_mode<synchronous>, transform_indices = @transform_7, window_bounds = array<i64: 1, 128>}, {pipeline_mode = #tpu.pipeline_mode<synchronous>, transform_indices = @transform_8, window_bounds = array<i64: 1, 128>}, {transform_indices = @transform_9, window_bounds = array<i64: 64, 128>}]} {
    %c0 = arith.constant 0 : index
    %c0_0 = arith.constant 0 : index
    %0 = vector.load %arg1[%c0, %c0_0] : memref<64x16xf32, #tpu.memory_space<vmem>>, vector<64x16xf32>
    %1 = arith.truncf %0 : vector<64x16xf32> to vector<64x16xbf16>
    %c0_1 = arith.constant 0 : index
    %c0_2 = arith.constant 0 : index
    %2 = vector.load %arg2[%c0_1, %c0_2] : memref<16x128xbf16, #tpu.memory_space<vmem>>, vector<16x128xbf16>
    %cst = arith.constant dense<0.000000e+00> : vector<64x128xf32>
    %3 = tpu.matmul %1, %2, %cst {dimension_numbers = #tpu.dot_dimension_numbers<[1], [0], [0], [1], [0, 0, 1, 1], [], []>} : vector<64x16xbf16>, vector<16x128xbf16>, vector<64x128xf32> -> vector<64x128xf32>
    %c0_3 = arith.constant 0 : index
    %c0_4 = arith.constant 0 : index
    %4 = vector.load %arg3[%c0_3, %c0_4] : memref<1x128xf32, #tpu.memory_space<vmem>>, vector<1x128xf32>
    %5 = vector.broadcast %4 : vector<1x128xf32> to vector<64x128xf32>
    %6 = arith.addf %3, %5 : vector<64x128xf32>
    %cst_5 = arith.constant 0.000000e+00 : f32
    %7 = vector.broadcast %cst_5 : f32 to vector<64x128xf32>
    %8 = arith.maximumf %6, %7 : vector<64x128xf32>
    %9 = arith.truncf %8 : vector<64x128xf32> to vector<64x128xbf16>
    %c0_6 = arith.constant 0 : index
    %c0_7 = arith.constant 0 : index
    %10 = vector.load %arg4[%c0_6, %c0_7] : memref<128x128xbf16, #tpu.memory_space<vmem>>, vector<128x128xbf16>
    %cst_8 = arith.constant dense<0.000000e+00> : vector<64x128xf32>
    %11 = tpu.matmul %9, %10, %cst_8 {dimension_numbers = #tpu.dot_dimension_numbers<[1], [0], [0], [1], [0, 0, 1, 1], [], []>} : vector<64x128xbf16>, vector<128x128xbf16>, vector<64x128xf32> -> vector<64x128xf32>
    %c0_9 = arith.constant 0 : index
    %c0_10 = arith.constant 0 : index
    %12 = vector.load %arg5[%c0_9, %c0_10] : memref<1x128xf32, #tpu.memory_space<vmem>>, vector<1x128xf32>
    %13 = vector.broadcast %12 : vector<1x128xf32> to vector<64x128xf32>
    %14 = arith.addf %11, %13 : vector<64x128xf32>
    %cst_11 = arith.constant 0.000000e+00 : f32
    %15 = vector.broadcast %cst_11 : f32 to vector<64x128xf32>
    %16 = arith.maximumf %14, %15 : vector<64x128xf32>
    %17 = arith.truncf %16 : vector<64x128xf32> to vector<64x128xbf16>
    %c0_12 = arith.constant 0 : index
    %c0_13 = arith.constant 0 : index
    %18 = vector.load %arg6[%c0_12, %c0_13] : memref<128x128xbf16, #tpu.memory_space<vmem>>, vector<128x128xbf16>
    %cst_14 = arith.constant dense<0.000000e+00> : vector<64x128xf32>
    %19 = tpu.matmul %17, %18, %cst_14 {dimension_numbers = #tpu.dot_dimension_numbers<[1], [0], [0], [1], [0, 0, 1, 1], [], []>} : vector<64x128xbf16>, vector<128x128xbf16>, vector<64x128xf32> -> vector<64x128xf32>
    %c0_15 = arith.constant 0 : index
    %c0_16 = arith.constant 0 : index
    %20 = vector.load %arg7[%c0_15, %c0_16] : memref<1x128xf32, #tpu.memory_space<vmem>>, vector<1x128xf32>
    %21 = vector.broadcast %20 : vector<1x128xf32> to vector<64x128xf32>
    %22 = arith.addf %19, %21 : vector<64x128xf32>
    %c0_17 = arith.constant 0 : index
    %c0_18 = arith.constant 0 : index
    %23 = vector.load %arg8[%c0_17, %c0_18] : memref<1x128xf32, #tpu.memory_space<vmem>>, vector<1x128xf32>
    %24 = vector.broadcast %23 : vector<1x128xf32> to vector<64x128xf32>
    %25 = arith.maximumf %22, %24 : vector<64x128xf32>
    %c0_19 = arith.constant 0 : index
    %c0_20 = arith.constant 0 : index
    %26 = vector.load %arg9[%c0_19, %c0_20] : memref<1x128xf32, #tpu.memory_space<vmem>>, vector<1x128xf32>
    %27 = vector.broadcast %26 : vector<1x128xf32> to vector<64x128xf32>
    %28 = arith.minimumf %25, %27 : vector<64x128xf32>
    %c0_21 = arith.constant 0 : index
    %c0_22 = arith.constant 0 : index
    %29 = vector.load %arg10[%c0_21, %c0_22] : memref<64x128xf32, #tpu.memory_space<vmem>>, vector<64x128xf32>
    tpu.vector_store %arg10[%c0_21, %c0_22], %28 {strides = array<i32>} : memref<64x128xf32, #tpu.memory_space<vmem>>, vector<64x128xf32>,
    return
  }
  func.func @transform_0(%arg0: i32) -> (i32, i32) {
    %c0_i32 = arith.constant 0 : i32
    %c0_i32_0 = arith.constant 0 : i32
    return %arg0, %c0_i32 : i32, i32
  }
  func.func @transform_1(%arg0: i32) -> (i32, i32) {
    %c0_i32 = arith.constant 0 : i32
    %c0_i32_0 = arith.constant 0 : i32
    %c0_i32_1 = arith.constant 0 : i32
    return %c0_i32, %c0_i32_0 : i32, i32
  }
  func.func @transform_2(%arg0: i32) -> (i32, i32) {
    %c0_i32 = arith.constant 0 : i32
    %c0_i32_0 = arith.constant 0 : i32
    %c0_i32_1 = arith.constant 0 : i32
    return %c0_i32, %c0_i32_0 : i32, i32
  }
  func.func @transform_3(%arg0: i32) -> (i32, i32) {
    %c0_i32 = arith.constant 0 : i32
    %c0_i32_0 = arith.constant 0 : i32
    %c0_i32_1 = arith.constant 0 : i32
    return %c0_i32, %c0_i32_0 : i32, i32
  }
  func.func @transform_4(%arg0: i32) -> (i32, i32) {
    %c0_i32 = arith.constant 0 : i32
    %c0_i32_0 = arith.constant 0 : i32
    %c0_i32_1 = arith.constant 0 : i32
    return %c0_i32, %c0_i32_0 : i32, i32
  }
  func.func @transform_5(%arg0: i32) -> (i32, i32) {
    %c0_i32 = arith.constant 0 : i32
    %c0_i32_0 = arith.constant 0 : i32
    %c0_i32_1 = arith.constant 0 : i32
    return %c0_i32, %c0_i32_0 : i32, i32
  }
  func.func @transform_6(%arg0: i32) -> (i32, i32) {
    %c0_i32 = arith.constant 0 : i32
    %c0_i32_0 = arith.constant 0 : i32
    %c0_i32_1 = arith.constant 0 : i32
    return %c0_i32, %c0_i32_0 : i32, i32
  }
  func.func @transform_7(%arg0: i32) -> (i32, i32) {
    %c0_i32 = arith.constant 0 : i32
    %c0_i32_0 = arith.constant 0 : i32
    %c0_i32_1 = arith.constant 0 : i32
    return %c0_i32, %c0_i32_0 : i32, i32
  }
  func.func @transform_8(%arg0: i32) -> (i32, i32) {
    %c0_i32 = arith.constant 0 : i32
    %c0_i32_0 = arith.constant 0 : i32
    %c0_i32_1 = arith.constant 0 : i32
    return %c0_i32, %c0_i32_0 : i32, i32
  }
  func.func @transform_9(%arg0: i32) -> (i32, i32) {
    %c0_i32 = arith.constant 0 : i32
    %c0_i32_0 = arith.constant 0 : i32
    return %arg0, %c0_i32 : i32, i32
  }
}

</mosaic_0001>

<llo_original>
// kernel: actor_forward.1
$region0: #{actor_forward.1}
  #allocation0 [shape = 'u32[]', space=smem, size = 0x4, offset = 0x4, fixed_abs, tag = 'smem constant byte address 0x4 - core index']
  #allocation1 [shape = 'u32[144,128]{1,0:T(1,128)}', space=vmem, size = 0x12000, scoped, tag = 'internal scratch']
  %s0 = inlined_call_operand.vmem [shape: f32[64,16], index: 0, kind: input, shape index: {}]
  %s1 = inlined_call_operand.vmem [shape: bf16[16,128], index: 1, kind: input, shape index: {}]
  %s2 = inlined_call_operand.vmem [shape: f32[1,128], index: 2, kind: input, shape index: {}]
  %s3 = inlined_call_operand.vmem [shape: bf16[128,128], index: 3, kind: input, shape index: {}]
  %s4 = inlined_call_operand.vmem [shape: f32[1,128], index: 4, kind: input, shape index: {}]
  %s5 = inlined_call_operand.hbm [shape: bf16[128,128], index: 5, kind: input, shape index: {}]
  %s6 = inlined_call_operand.vmem [shape: f32[1,128], index: 6, kind: input, shape index: {}]
  %s7 = inlined_call_operand.vmem [shape: f32[1,128], index: 7, kind: input, shape index: {}]
  %s8 = inlined_call_operand.vmem [shape: f32[1,128], index: 8, kind: input, shape index: {}]
  %s9 = inlined_call_operand.vmem [shape: f32[64,128], index: 9, kind: output, shape index: {}]
  %s10 = sld [smem:[#allocation0]]
  $region50: #{actor_forward.1} parent=0
    _
  %s12 = ssub.s32 1, %s10
  %s13 = scalar_select 0, %s12, %s10
  $region1: #{actor_forward.1} parent=0
    #allocation2 [shape = 'u8[32768]{0}', space=vmem, size = 0x8000, scoped, tag = 'input window, operand 5, single buffered']
    #allocation3 [shape = 's32[1]{0}', space=sflag, size = 0x4, scoped, tag = 'scoped memory for actor_forward.1']
    %14 = vsyncpa [#allocation3], 0
    // Predicated region
    $region2: #{actor_forward.1} parent=1 // pred_check
      _
    $region3: #{actor_forward.1} parent=1 // pred_check_branch
      %16 = sbr.rel (0) target = $region5
    $region4: #{actor_forward.1} parent=1 // pred_region
      _
    $region5: #{actor_forward.1} parent=1 // pred_fallthru
      _
    // Predicated region
    $region6: #{actor_forward.1} parent=1 // pred_check
      _
    $region7: #{actor_forward.1} parent=1 // pred_check_branch
      %18 = sbr.rel (0) target = $region9
    $region8: #{actor_forward.1} parent=1 // pred_region
      _
    $region9: #{actor_forward.1} parent=1 // pred_fallthru
      _
    // Predicated region
    $region10: #{actor_forward.1} parent=1 // pred_check
      _
    $region11: #{actor_forward.1} parent=1 // pred_check_branch
      %20 = sbr.rel (0) target = $region13
    $region12: #{actor_forward.1} parent=1 // pred_region
      _
    $region13: #{actor_forward.1} parent=1 // pred_fallthru
      _
    // Predicated region
    $region14: #{actor_forward.1} parent=1 // pred_check
      _
    $region15: #{actor_forward.1} parent=1 // pred_check_branch
      %22 = sbr.rel (0) target = $region17
    $region16: #{actor_forward.1} parent=1 // pred_region
      _
    $region17: #{actor_forward.1} parent=1 // pred_fallthru
      _
    // Predicated region
    $region18: #{actor_forward.1} parent=1 // pred_check
      _
    $region19: #{actor_forward.1} parent=1 // pred_check_branch
      %24 = sbr.rel (0) target = $region21
    $region20: #{actor_forward.1} parent=1 // pred_region
      _
    $region21: #{actor_forward.1} parent=1 // pred_fallthru
      _
    // Predicated region
    $region22: #{actor_forward.1} parent=1 // pred_check
      _
    $region23: #{actor_forward.1} parent=1 // pred_check_branch
      %26 = sbr.rel (0) target = $region25
    $region24: #{actor_forward.1} parent=1 // pred_region
      %s28 = ssub.s32 1024, 1024
      %29 = vsyncadd [#allocation3], %s28
      %s30 = sshll.u32 [#allocation2], 4
      %s31 = int_to_ptr.vmem [resolvable:$true] %s30
      %36 = dma.hbm_to_vmem [thread:$0]  %s5, 1024, %s31, [#allocation3], 64, 64, 4
    $region25: #{actor_forward.1} parent=1 // pred_fallthru
      _
    // Predicated region
    $region26: #{actor_forward.1} parent=1 // pred_check
      _
    $region27: #{actor_forward.1} parent=1 // pred_check_branch
      %38 = sbr.rel (0) target = $region29
    $region28: #{actor_forward.1} parent=1 // pred_region
      _
    $region29: #{actor_forward.1} parent=1 // pred_fallthru
      _
    // Predicated region
    $region30: #{actor_forward.1} parent=1 // pred_check
      _
    $region31: #{actor_forward.1} parent=1 // pred_check_branch
      %40 = sbr.rel (0) target = $region33
    $region32: #{actor_forward.1} parent=1 // pred_region
      _
    $region33: #{actor_forward.1} parent=1 // pred_fallthru
      _
    // Predicated region
    $region34: #{actor_forward.1} parent=1 // pred_check
      _
    $region35: #{actor_forward.1} parent=1 // pred_check_branch
      %42 = sbr.rel (0) target = $region37
    $region36: #{actor_forward.1} parent=1 // pred_region
      _
    $region37: #{actor_forward.1} parent=1 // pred_fallthru
      _
    // Predicated region
    $region38: #{actor_forward.1} parent=1 // pred_check
      _
    $region39: #{actor_forward.1} parent=1 // pred_check_branch
      %44 = sbr.rel (0) target = $region41
    $region40: #{actor_forward.1} parent=1 // pred_region
      %45 = dma.done [#allocation3], 1024
    $region41: #{actor_forward.1} parent=1 // pred_fallthru
      _
    %v47 = vld [vmem:[%s0] sm:$0xff]
    %v48 = vld [vmem:[%s0 + $0x8] sm:$0xff]
    %v49 = vld [vmem:[%s0 + $0x10] sm:$0xff]
    %v50 = vld [vmem:[%s0 + $0x18] sm:$0xff]
    %v51 = vld [vmem:[%s0 + $0x20] sm:$0xff]
    %v52 = vld [vmem:[%s0 + $0x28] sm:$0xff]
    %v53 = vld [vmem:[%s0 + $0x30] sm:$0xff]
    %v54 = vld [vmem:[%s0 + $0x38] sm:$0xff]
    %v55 = vpack.c.bf16 %v48, %v47
    %v56 = vpack.c.bf16 %v50, %v49
    %v57 = vpack.c.bf16 %v52, %v51
    %v58 = vpack.c.bf16 %v54, %v53
    %v59 = vld [vmem:[%s1] sm:$0xf]
    %v60 = vld [vmem:[%s1 + $0x4] sm:$0xf]
    %v61 = vld [vmem:[%s2] sm:$0x1]
    %v63 = vlaneseq
    %v64 = vshrl.u32 %v63, 7
    %v65 = vsub.s32 0, %v64
    %v66 = vrot.slane %v61, %v65
    %v70 = vunpack.c.l.b16 %v59
    %v71 = vunpack.c.l.b16 %v60
    %v72 = vpack.c.b16 %v71, %v70
    %vm74 = vcmask 130048
    %v76 = vsel %vm74, %v55, 0
    %v79 = vsel %vm74, %v56, 0
    %v82 = vsel %vm74, %v57, 0
    %v85 = vsel %vm74, %v58, 0
    %87 = vmatprep.subr.bf16.mxu0 0
    %88 = vmatpush1.bf16.msra.mxu0 0
    %89 = vmatprep.subr.bf16.mxu0 0
    %90 = vmatpush1.bf16.msra.mxu0 0
    %91 = vmatprep.subr.bf16.mxu0 0
    %92 = vmatpush1.bf16.msra.mxu0 0
    %93 = vmatprep.subr.bf16.mxu0 0
    %94 = vmatpush1.bf16.msra.mxu0 0
    %95 = vmatprep.subr.bf16.mxu0 0
    %96 = vmatpush1.bf16.msra.mxu0 0
    %97 = vmatprep.subr.bf16.mxu0 0
    %98 = vmatpush1.bf16.msra.mxu0 0
    %99 = vmatprep.subr.bf16.mxu0 0
    %100 = vmatpush1.bf16.msra.mxu0 0
    %101 = vmatprep.subr.bf16.mxu0 0
    %102 = vmatpush1.bf16.msra.mxu0 %v72
    %103 = vmatprep.subr.bf16.mxu0 0
    %104 = vmatpush2.bf16.msra.mxu0 0
    %105 = vmatprep.subr.bf16.mxu0 0
    %106 = vmatpush2.bf16.msra.mxu0 0
    %107 = vmatprep.subr.bf16.mxu0 0
    %108 = vmatpush2.bf16.msra.mxu0 0
    %109 = vmatprep.subr.bf16.mxu0 0
    %110 = vmatpush2.bf16.msra.mxu0 0
    %111 = vmatprep.subr.bf16.mxu0 0
    %112 = vmatpush2.bf16.msra.mxu0 0
    %113 = vmatprep.subr.bf16.mxu0 0
    %114 = vmatpush2.bf16.msra.mxu0 0
    %115 = vmatprep.subr.bf16.mxu0 0
    %116 = vmatpush2.bf16.msra.mxu0 0
    %117 = vmatprep.subr.bf16.mxu0 0
    %118 = vmatpush2.bf16.msra.mxu0 0
    %119 = vmatprep.mubr.bf16.mxu0 0
    %120 = vmatmul.mubr.bf16.gmra.mxu0 %v76
    %v121 = vpop.f32.mrf.mxu0
    %v122 = vadd.f32 %v66, %v121
    %v123 = vpop.f32.mrf.mxu0
    %v124 = vpop.f32.mrf.mxu0
    %v125 = vadd.f32 %v66, %v124
    %v126 = vpop.f32.mrf.mxu0
    %127 = vmatprep.mubr.bf16.mxu0 0
    %128 = vmatmul.mubr.bf16.gmra.mxu0 %v79
    %v129 = vpop.f32.mrf.mxu0
    %v130 = vadd.f32 %v66, %v129
    %v131 = vpop.f32.mrf.mxu0
    %v132 = vpop.f32.mrf.mxu0
    %v133 = vadd.f32 %v66, %v132
    %v134 = vpop.f32.mrf.mxu0
    %135 = vmatprep.mubr.bf16.mxu0 0
    %136 = vmatmul.mubr.bf16.gmra.mxu0 %v82
    %v137 = vpop.f32.mrf.mxu0
    %v138 = vadd.f32 %v66, %v137
    %v139 = vpop.f32.mrf.mxu0
    %v140 = vpop.f32.mrf.mxu0
    %v141 = vadd.f32 %v66, %v140
    %v142 = vpop.f32.mrf.mxu0
    %143 = vmatprep.mubr.bf16.mxu0 0
    %144 = vmatmul.mubr.bf16.gmra.mxu0 %v85
    %v145 = vpop.f32.mrf.mxu0
    %v146 = vadd.f32 %v66, %v145
    %v147 = vpop.f32.mrf.mxu0
    %v148 = vpop.f32.mrf.mxu0
    %v149 = vadd.f32 %v66, %v148
    %v150 = vpop.f32.mrf.mxu0
    %151 = vdwg.mxu0
    %v152 = vmax.f32 %v122, 0.0
    %v153 = vmax.f32 %v125, 0.0
    %v154 = vmax.f32 %v130, 0.0
    %v155 = vmax.f32 %v133, 0.0
    %v156 = vmax.f32 %v138, 0.0
    %v157 = vmax.f32 %v141, 0.0
    %v158 = vmax.f32 %v146, 0.0
    %v159 = vmax.f32 %v149, 0.0
    %v160 = vpack.c.bf16 %v153, %v152
    %v161 = vpack.c.bf16 %v155, %v154
    %v162 = vpack.c.bf16 %v157, %v156
    %v163 = vpack.c.bf16 %v159, %v158
    %v164 = vld [vmem:[%s3] sm:$0xf]
    %v165 = vld [vmem:[%s3 + $0x4] sm:$0xf]
    %v166 = vld [vmem:[%s3 + $0x8] sm:$0xf]
    %v167 = vld [vmem:[%s3 + $0xc] sm:$0xf]
    %v168 = vld [vmem:[%s3 + $0x10] sm:$0xf]
    %v169 = vld [vmem:[%s3 + $0x14] sm:$0xf]
    %v170 = vld [vmem:[%s3 + $0x18] sm:$0xf]
    %v171 = vld [vmem:[%s3 + $0x1c] sm:$0xf]
    %v172 = vld [vmem:[%s3 + $0x20] sm:$0xf]
    %v173 = vld [vmem:[%s3 + $0x24] sm:$0xf]
    %v174 = vld [vmem:[%s3 + $0x28] sm:$0xf]
    %v175 = vld [vmem:[%s3 + $0x2c] sm:$0xf]
    %v176 = vld [vmem:[%s3 + $0x30] sm:$0xf]
    %v177 = vld [vmem:[%s3 + $0x34] sm:$0xf]
    %v178 = vld [vmem:[%s3 + $0x38] sm:$0xf]
    %v179 = vld [vmem:[%s3 + $0x3c] sm:$0xf]
    %v180 = vld [vmem:[%s4] sm:$0x1]
    %v182 = vlaneseq
    %v183 = vshrl.u32 %v182, 7
    %v184 = vsub.s32 0, %v183
    %v185 = vrot.slane %v180, %v184
    %v203 = vunpack.c.l.b16 %v164
    %v204 = vunpack.c.l.b16 %v165
    %v205 = vunpack.c.l.b16 %v166
    %v206 = vunpack.c.l.b16 %v167
    %v207 = vunpack.c.l.b16 %v168
    %v208 = vunpack.c.l.b16 %v169
    %v209 = vunpack.c.l.b16 %v170
    %v210 = vunpack.c.l.b16 %v171
    %v211 = vunpack.c.l.b16 %v172
    %v212 = vunpack.c.l.b16 %v173
    %v213 = vunpack.c.l.b16 %v174
    %v214 = vunpack.c.l.b16 %v175
    %v215 = vunpack.c.l.b16 %v176
    %v216 = vunpack.c.l.b16 %v177
    %v217 = vunpack.c.l.b16 %v178
    %v218 = vunpack.c.l.b16 %v179
    %v219 = vpack.c.b16 %v204, %v203
    %v220 = vpack.c.b16 %v206, %v205
    %v221 = vpack.c.b16 %v208, %v207
    %v222 = vpack.c.b16 %v210, %v209
    %v223 = vpack.c.b16 %v212, %v211
    %v224 = vpack.c.b16 %v214, %v213
    %v225 = vpack.c.b16 %v216, %v215
    %v226 = vpack.c.b16 %v218, %v217
    %235 = vmatprep.subr.bf16.mxu0 0
    %236 = vmatpush1.bf16.msra.mxu0 %v226
    %237 = vmatprep.subr.bf16.mxu0 0
    %238 = vmatpush1.bf16.msra.mxu0 %v225
    %239 = vmatprep.subr.bf16.mxu0 0
    %240 = vmatpush1.bf16.msra.mxu0 %v224
    %241 = vmatprep.subr.bf16.mxu0 0
    %242 = vmatpush1.bf16.msra.mxu0 %v223
    %243 = vmatprep.subr.bf16.mxu0 0
    %244 = vmatpush1.bf16.msra.mxu0 %v222
    %245 = vmatprep.subr.bf16.mxu0 0
    %246 = vmatpush1.bf16.msra.mxu0 %v221
    %247 = vmatprep.subr.bf16.mxu0 0
    %248 = vmatpush1.bf16.msra.mxu0 %v220
    %249 = vmatprep.subr.bf16.mxu0 0
    %250 = vmatpush1.bf16.msra.mxu0 %v219
    %251 = vmatprep.subr.bf16.mxu0 0
    %252 = vmatpush2.bf16.msra.mxu0 0
    %253 = vmatprep.subr.bf16.mxu0 0
    %254 = vmatpush2.bf16.msra.mxu0 0
    %255 = vmatprep.subr.bf16.mxu0 0
    %256 = vmatpush2.bf16.msra.mxu0 0
    %257 = vmatprep.subr.bf16.mxu0 0
    %258 = vmatpush2.bf16.msra.mxu0 0
    %259 = vmatprep.subr.bf16.mxu0 0
    %260 = vmatpush2.bf16.msra.mxu0 0
    %261 = vmatprep.subr.bf16.mxu0 0
    %262 = vmatpush2.bf16.msra.mxu0 0
    %263 = vmatprep.subr.bf16.mxu0 0
    %264 = vmatpush2.bf16.msra.mxu0 0
    %265 = vmatprep.subr.bf16.mxu0 0
    %266 = vmatpush2.bf16.msra.mxu0 0
    %267 = vmatprep.mubr.bf16.mxu0 0
    %268 = vmatmul.mubr.bf16.gmra.mxu0 %v160
    %v269 = vpop.f32.mrf.mxu0
    %v270 = vadd.f32 %v185, %v269
    %v271 = vpop.f32.mrf.mxu0
    %v272 = vpop.f32.mrf.mxu0
    %v273 = vadd.f32 %v185, %v272
    %v274 = vpop.f32.mrf.mxu0
    %275 = vmatprep.mubr.bf16.mxu0 0
    %276 = vmatmul.mubr.bf16.gmra.mxu0 %v161
    %v277 = vpop.f32.mrf.mxu0
    %v278 = vadd.f32 %v185, %v277
    %v279 = vpop.f32.mrf.mxu0
    %v280 = vpop.f32.mrf.mxu0
    %v281 = vadd.f32 %v185, %v280
    %v282 = vpop.f32.mrf.mxu0
    %283 = vmatprep.mubr.bf16.mxu0 0
    %284 = vmatmul.mubr.bf16.gmra.mxu0 %v162
    %v285 = vpop.f32.mrf.mxu0
    %v286 = vadd.f32 %v185, %v285
    %v287 = vpop.f32.mrf.mxu0
    %v288 = vpop.f32.mrf.mxu0
    %v289 = vadd.f32 %v185, %v288
    %v290 = vpop.f32.mrf.mxu0
    %291 = vmatprep.mubr.bf16.mxu0 0
    %292 = vmatmul.mubr.bf16.gmra.mxu0 %v163
    %v293 = vpop.f32.mrf.mxu0
    %v294 = vadd.f32 %v185, %v293
    %v295 = vpop.f32.mrf.mxu0
    %v296 = vpop.f32.mrf.mxu0
    %v297 = vadd.f32 %v185, %v296
    %v298 = vpop.f32.mrf.mxu0
    %299 = vdwg.mxu0
    %v300 = vmax.f32 %v270, 0.0
    %v301 = vmax.f32 %v273, 0.0
    %v302 = vmax.f32 %v278, 0.0
    %v303 = vmax.f32 %v281, 0.0
    %v304 = vmax.f32 %v286, 0.0
    %v305 = vmax.f32 %v289, 0.0
    %v306 = vmax.f32 %v294, 0.0
    %v307 = vmax.f32 %v297, 0.0
    %v308 = vpack.c.bf16 %v301, %v300
    %v309 = vpack.c.bf16 %v303, %v302
    %v310 = vpack.c.bf16 %v305, %v304
    %v311 = vpack.c.bf16 %v307, %v306
    %v312 = vld [vmem:[#allocation2] sm:$0xf]
    %v313 = vld [vmem:[#allocation2 + $0x4] sm:$0xf]
    %v314 = vld [vmem:[#allocation2 + $0x8] sm:$0xf]
    %v315 = vld [vmem:[#allocation2 + $0xc] sm:$0xf]
    %v316 = vld [vmem:[#allocation2 + $0x10] sm:$0xf]
    %v317 = vld [vmem:[#allocation2 + $0x14] sm:$0xf]
    %v318 = vld [vmem:[#allocation2 + $0x18] sm:$0xf]
    %v319 = vld [vmem:[#allocation2 + $0x1c] sm:$0xf]
    %v320 = vld [vmem:[#allocation2 + $0x20] sm:$0xf]
    %v321 = vld [vmem:[#allocation2 + $0x24] sm:$0xf]
    %v322 = vld [vmem:[#allocation2 + $0x28] sm:$0xf]
    %v323 = vld [vmem:[#allocation2 + $0x2c] sm:$0xf]
    %v324 = vld [vmem:[#allocation2 + $0x30] sm:$0xf]
    %v325 = vld [vmem:[#allocation2 + $0x34] sm:$0xf]
    %v326 = vld [vmem:[#allocation2 + $0x38] sm:$0xf]
    %v327 = vld [vmem:[#allocation2 + $0x3c] sm:$0xf]
    %v328 = vld [vmem:[%s6] sm:$0x1]
    %v330 = vlaneseq
    %v331 = vshrl.u32 %v330, 7
    %v332 = vsub.s32 0, %v331
    %v333 = vrot.slane %v328, %v332
    %v351 = vunpack.c.l.b16 %v312
    %v352 = vunpack.c.l.b16 %v313
    %v353 = vunpack.c.l.b16 %v314
    %v354 = vunpack.c.l.b16 %v315
    %v355 = vunpack.c.l.b16 %v316
    %v356 = vunpack.c.l.b16 %v317
    %v357 = vunpack.c.l.b16 %v318
    %v358 = vunpack.c.l.b16 %v319
    %v359 = vunpack.c.l.b16 %v320
    %v360 = vunpack.c.l.b16 %v321
    %v361 = vunpack.c.l.b16 %v322
    %v362 = vunpack.c.l.b16 %v323
    %v363 = vunpack.c.l.b16 %v324
    %v364 = vunpack.c.l.b16 %v325
    %v365 = vunpack.c.l.b16 %v326
    %v366 = vunpack.c.l.b16 %v327
    %v367 = vpack.c.b16 %v352, %v351
    %v368 = vpack.c.b16 %v354, %v353
    %v369 = vpack.c.b16 %v356, %v355
    %v370 = vpack.c.b16 %v358, %v357
    %v371 = vpack.c.b16 %v360, %v359
    %v372 = vpack.c.b16 %v362, %v361
    %v373 = vpack.c.b16 %v364, %v363
    %v374 = vpack.c.b16 %v366, %v365
    %383 = vmatprep.subr.bf16.mxu0 0
    %384 = vmatpush1.bf16.msra.mxu0 %v374
    %385 = vmatprep.subr.bf16.mxu0 0
    %386 = vmatpush1.bf16.msra.mxu0 %v373
    %387 = vmatprep.subr.bf16.mxu0 0
    %388 = vmatpush1.bf16.msra.mxu0 %v372
    %389 = vmatprep.subr.bf16.mxu0 0
    %390 = vmatpush1.bf16.msra.mxu0 %v371
    %391 = vmatprep.subr.bf16.mxu0 0
    %392 = vmatpush1.bf16.msra.mxu0 %v370
    %393 = vmatprep.subr.bf16.mxu0 0
    %394 = vmatpush1.bf16.msra.mxu0 %v369
    %395 = vmatprep.subr.bf16.mxu0 0
    %396 = vmatpush1.bf16.msra.mxu0 %v368
    %397 = vmatprep.subr.bf16.mxu0 0
    %398 = vmatpush1.bf16.msra.mxu0 %v367
    %399 = vmatprep.subr.bf16.mxu0 0
    %400 = vmatpush2.bf16.msra.mxu0 0
    %401 = vmatprep.subr.bf16.mxu0 0
    %402 = vmatpush2.bf16.msra.mxu0 0
    %403 = vmatprep.subr.bf16.mxu0 0
    %404 = vmatpush2.bf16.msra.mxu0 0
    %405 = vmatprep.subr.bf16.mxu0 0
    %406 = vmatpush2.bf16.msra.mxu0 0
    %407 = vmatprep.subr.bf16.mxu0 0
    %408 = vmatpush2.bf16.msra.mxu0 0
    %409 = vmatprep.subr.bf16.mxu0 0
    %410 = vmatpush2.bf16.msra.mxu0 0
    %411 = vmatprep.subr.bf16.mxu0 0
    %412 = vmatpush2.bf16.msra.mxu0 0
    %413 = vmatprep.subr.bf16.mxu0 0
    %414 = vmatpush2.bf16.msra.mxu0 0
    %415 = vmatprep.mubr.bf16.mxu0 0
    %416 = vmatmul.mubr.bf16.gmra.mxu0 %v308
    %v417 = vpop.f32.mrf.mxu0
    %v418 = vadd.f32 %v333, %v417
    %v419 = vpop.f32.mrf.mxu0
    %v420 = vpop.f32.mrf.mxu0
    %v421 = vadd.f32 %v333, %v420
    %v422 = vpop.f32.mrf.mxu0
    %423 = vmatprep.mubr.bf16.mxu0 0
    %424 = vmatmul.mubr.bf16.gmra.mxu0 %v309
    %v425 = vpop.f32.mrf.mxu0
    %v426 = vadd.f32 %v333, %v425
    %v427 = vpop.f32.mrf.mxu0
    %v428 = vpop.f32.mrf.mxu0
    %v429 = vadd.f32 %v333, %v428
    %v430 = vpop.f32.mrf.mxu0
    %431 = vmatprep.mubr.bf16.mxu0 0
    %432 = vmatmul.mubr.bf16.gmra.mxu0 %v310
    %v433 = vpop.f32.mrf.mxu0
    %v434 = vadd.f32 %v333, %v433
    %v435 = vpop.f32.mrf.mxu0
    %v436 = vpop.f32.mrf.mxu0
    %v437 = vadd.f32 %v333, %v436
    %v438 = vpop.f32.mrf.mxu0
    %439 = vmatprep.mubr.bf16.mxu0 0
    %440 = vmatmul.mubr.bf16.gmra.mxu0 %v311
    %v441 = vpop.f32.mrf.mxu0
    %v442 = vadd.f32 %v333, %v441
    %v443 = vpop.f32.mrf.mxu0
    %v444 = vpop.f32.mrf.mxu0
    %v445 = vadd.f32 %v333, %v444
    %v446 = vpop.f32.mrf.mxu0
    %447 = vdwg.mxu0
    %v448 = vld [vmem:[%s7] sm:$0x1]
    %v450 = vlaneseq
    %v451 = vshrl.u32 %v450, 7
    %v452 = vsub.s32 0, %v451
    %v453 = vrot.slane %v448, %v452
    %v455 = vmax.f32 %v418, %v453
    %v456 = vmax.f32 %v421, %v453
    %v457 = vmax.f32 %v426, %v453
    %v458 = vmax.f32 %v429, %v453
    %v459 = vmax.f32 %v434, %v453
    %v460 = vmax.f32 %v437, %v453
    %v461 = vmax.f32 %v442, %v453
    %v462 = vmax.f32 %v445, %v453
    %v463 = vld [vmem:[%s8] sm:$0x1]
    %v465 = vlaneseq
    %v466 = vshrl.u32 %v465, 7
    %v467 = vsub.s32 0, %v466
    %v468 = vrot.slane %v463, %v467
    %v470 = vmin.f32 %v455, %v468
    %v471 = vmin.f32 %v456, %v468
    %v472 = vmin.f32 %v457, %v468
    %v473 = vmin.f32 %v458, %v468
    %v474 = vmin.f32 %v459, %v468
    %v475 = vmin.f32 %v460, %v468
    %v476 = vmin.f32 %v461, %v468
    %v477 = vmin.f32 %v462, %v468
    %478 = vst [vmem:[%s9] sm:$0xff] %v470
    %479 = vst [vmem:[%s9 + $0x8] sm:$0xff] %v471
    %480 = vst [vmem:[%s9 + $0x10] sm:$0xff] %v472
    %481 = vst [vmem:[%s9 + $0x18] sm:$0xff] %v473
    %482 = vst [vmem:[%s9 + $0x20] sm:$0xff] %v474
    %483 = vst [vmem:[%s9 + $0x28] sm:$0xff] %v475
    %484 = vst [vmem:[%s9 + $0x30] sm:$0xff] %v476
    %485 = vst [vmem:[%s9 + $0x38] sm:$0xff] %v477
    // Predicated region
    $region42: #{actor_forward.1} parent=1 // pred_check
      _
    $region43: #{actor_forward.1} parent=1 // pred_check_branch
      %487 = sbr.rel (0) target = $region45
    $region44: #{actor_forward.1} parent=1 // pred_region
      _
    $region45: #{actor_forward.1} parent=1 // pred_fallthru
      _
    // Predicated region
    $region46: #{actor_forward.1} parent=1 // pred_check
      _
    $region47: #{actor_forward.1} parent=1 // pred_check_branch
      %489 = sbr.rel (0) target = $region49
    $region48: #{actor_forward.1} parent=1 // pred_region
      _
    $region49: #{actor_forward.1} parent=1 // pred_fallthru
      _
    %490 = vsyncpa [#allocation3], 1

</llo_original>
